<compile_context>
chip_gen: v7x
topology: tpu7x:2x2x1
jax: 0.10.0
libtpu: 0.0.40
codegen_flags: <defaults>
</compile_context>

<pallas_src>
import jax
import jax.numpy as jnp
from jax.experimental import pallas as pl
from jax.experimental.pallas import tpu as pltpu


# ----------------------------- config (synthetic, small) -----------------------------
B, T = 2, 8                      # batch, time steps
F_IMU, D_IMU = 5, 6              # imu frames per step, imu channel dim
F_E4, D_E4 = 3, 3                # e4acc frames, channel dim
F_BB, D_BB = 2, 4                # bbox frames, channel dim
F_KP, D_KP, N_KP = 2, 17, 2      # keypoint frames, joints, coords

IMU_IN = F_IMU * D_IMU           # 30
E4_IN = F_E4 * D_E4              # 9
BB_IN = F_BB * D_BB              # 8
KP_IN = F_KP * D_KP * N_KP       # 68

IMU_EMB = 32
E4_EMB = 16
BB_EMB = 16
KP_EMB = 32
HT_EMB = 8
PR_EMB = 8
CONCAT_DIM = IMU_EMB + E4_EMB + BB_EMB + KP_EMB + HT_EMB + PR_EMB  # 112

# packed-input column layout: real features + 2x one-hot(2) + 1 bias column
K_REAL = IMU_IN + E4_IN + BB_IN + KP_IN + 2 + 2 + 1                 # 120
K_PAD = 128                      # lane-dense contraction dim
N_PAD = 128                      # lane-dense output dim (>= CONCAT_DIM)
assert K_REAL <= K_PAD and CONCAT_DIM <= N_PAD


def _round_up(x, m):
    return (x + m - 1) // m * m


# ----------------------------------- kernel -----------------------------------
def embedding_kernel(x_ref, w_ref, out_ref):
    # One fused block-diagonal matmul: (TM,128) @ (128,128) -> (TM,128).
    # Bias is absorbed via the constant-1 column of x and the bias row of w.
    out_ref[...] = jnp.dot(
        x_ref[...], w_ref[...], preferred_element_type=jnp.float32
    ).astype(out_ref.dtype)


# ------------------------------ weight fusion (host/XLA) ------------------------------
def build_fused_weight(params):
    """Pack 4 Linear weights+biases and 2 embedding tables into one (128,128)."""
    (w_imu, b_imu, w_e4, b_e4, w_bb, b_bb, w_kp, b_kp, ht_tab, pr_tab) = params
    W = jnp.zeros((K_PAD, N_PAD), jnp.float32)
    r, c = 0, 0
    W = W.at[r:r + IMU_IN, c:c + IMU_EMB].set(w_imu); r += IMU_IN; c += IMU_EMB
    W = W.at[r:r + E4_IN, c:c + E4_EMB].set(w_e4);    r += E4_IN;  c += E4_EMB
    W = W.at[r:r + BB_IN, c:c + BB_EMB].set(w_bb);    r += BB_IN;  c += BB_EMB
    W = W.at[r:r + KP_IN, c:c + KP_EMB].set(w_kp);    r += KP_IN;  c += KP_EMB
    W = W.at[r:r + 2, c:c + HT_EMB].set(ht_tab);      r += 2;      c += HT_EMB
    W = W.at[r:r + 2, c:c + PR_EMB].set(pr_tab);      r += 2;      c += PR_EMB
    # bias row (multiplied by the constant-1 column of the packed input)
    bias = jnp.concatenate(
        [b_imu[0], b_e4[0], b_bb[0], b_kp[0],
         jnp.zeros((HT_EMB + PR_EMB,), jnp.float32)], axis=0)      # (112,)
    W = W.at[r, 0:CONCAT_DIM].set(bias)
    return W


# ----------------------------------- wrapper -----------------------------------
def embedding_forward(imu, keypoint, e4acc, bbox, ht, printer, params):
    b, t = imu.shape[0], imu.shape[1]
    m = b * t

    w_fused = build_fused_weight(params)

    # pack activations: 'b t f d -> (b t) (f d)' + one-hot indices + bias-1 col + pad
    ht_oh = jax.nn.one_hot(ht.reshape(m).astype(jnp.int32), 2, dtype=jnp.float32)
    pr_oh = jax.nn.one_hot(printer.reshape(m).astype(jnp.int32), 2, dtype=jnp.float32)
    x_packed = jnp.concatenate(
        [imu.reshape(m, -1).astype(jnp.float32),
         e4acc.reshape(m, -1).astype(jnp.float32),
         bbox.reshape(m, -1).astype(jnp.float32),
         keypoint.reshape(m, -1).astype(jnp.float32),
         ht_oh, pr_oh,
         jnp.ones((m, 1), jnp.float32),
         jnp.zeros((m, K_PAD - K_REAL), jnp.float32)],
        axis=-1)                                                    # (m, 128)

    # row tiling: one grid step for small m, 256-row tiles otherwise; pad rows
    # so nothing is silently dropped when m is not a multiple of the tile.
    tm = 256 if m >= 256 else _round_up(m, 8)
    m_pad = _round_up(m, tm)
    if m_pad != m:
        x_packed = jnp.pad(x_packed, ((0, m_pad - m), (0, 0)))

    out2 = pl.pallas_call(
        embedding_kernel,
        out_shape=jax.ShapeDtypeStruct((m_pad, N_PAD), jnp.float32),
        grid_spec=pltpu.PrefetchScalarGridSpec(
            num_scalar_prefetch=0,
            grid=(m_pad // tm,),
            in_specs=[
                pl.BlockSpec((tm, K_PAD), lambda i: (i, 0)),        # packed activations
                pl.BlockSpec((K_PAD, N_PAD), lambda i: (0, 0)),     # fused weight (resident)
            ],
            out_specs=pl.BlockSpec((tm, N_PAD), lambda i: (i, 0)),  # lane-dense output
        ),
        compiler_params=pltpu.CompilerParams(
            dimension_semantics=("parallel",)),                     # shards rows on v7x
    )(x_packed, w_fused)

    return out2[:m, :CONCAT_DIM].reshape(b, t, CONCAT_DIM)


# --------------------------------- reference ---------------------------------
def embedding_forward_ref(imu, keypoint, e4acc, bbox, ht, printer, params):
    (w_imu, b_imu, w_e4, b_e4, w_bb, b_bb, w_kp, b_kp, ht_tab, pr_tab) = params
    b, t = imu.shape[0], imu.shape[1]
    x_imu = imu.reshape(b, t, -1) @ w_imu + b_imu[0]
    x_e4 = e4acc.reshape(b, t, -1) @ w_e4 + b_e4[0]
    x_bb = bbox.reshape(b, t, -1) @ w_bb + b_bb[0]
    x_kp = keypoint.reshape(b, t, -1) @ w_kp + b_kp[0]
    x_ht = ht_tab[ht.astype(jnp.int32)]
    x_pr = pr_tab[printer.astype(jnp.int32)]
    return jnp.concatenate([x_imu, x_e4, x_bb, x_kp, x_ht, x_pr], axis=2)


# ------------------------------------ main ------------------------------------
if __name__ == "__main__":
    key = jax.random.PRNGKey(0)
    keys = jax.random.split(key, 16)

    # deterministic "parameters" (Linear weights pre-transposed to (in, out); bias (1, out))
    w_imu = jax.random.normal(keys[0], (IMU_IN, IMU_EMB), jnp.float32) * 0.05
    b_imu = jax.random.normal(keys[1], (1, IMU_EMB), jnp.float32) * 0.05
    w_e4 = jax.random.normal(keys[2], (E4_IN, E4_EMB), jnp.float32) * 0.05
    b_e4 = jax.random.normal(keys[3], (1, E4_EMB), jnp.float32) * 0.05
    w_bb = jax.random.normal(keys[4], (BB_IN, BB_EMB), jnp.float32) * 0.05
    b_bb = jax.random.normal(keys[5], (1, BB_EMB), jnp.float32) * 0.05
    w_kp = jax.random.normal(keys[6], (KP_IN, KP_EMB), jnp.float32) * 0.05
    b_kp = jax.random.normal(keys[7], (1, KP_EMB), jnp.float32) * 0.05
    ht_tab = jax.random.normal(keys[8], (2, HT_EMB), jnp.float32)
    pr_tab = jax.random.normal(keys[9], (2, PR_EMB), jnp.float32)
    params = (w_imu, b_imu, w_e4, b_e4, w_bb, b_bb, w_kp, b_kp, ht_tab, pr_tab)

    # example inputs (PyTorch shapes: imu/e4acc/bbox 'b t f d', keypoint 'b t f d n')
    imu = jax.random.normal(keys[10], (B, T, F_IMU, D_IMU), jnp.float32)
    e4acc = jax.random.normal(keys[11], (B, T, F_E4, D_E4), jnp.float32)
    bbox = jax.random.normal(keys[12], (B, T, F_BB, D_BB), jnp.float32)
    keypoint = jax.random.normal(keys[13], (B, T, F_KP, D_KP, N_KP), jnp.float32)
    ht = jax.random.randint(keys[14], (B, T), 0, 2, jnp.int32)
    printer = jax.random.randint(keys[15], (B, T), 0, 2, jnp.int32)

    out = embedding_forward(imu, keypoint, e4acc, bbox, ht, printer, params)
    out = jax.block_until_ready(out)

    ref = embedding_forward_ref(imu, keypoint, e4acc, bbox, ht, printer, params)
    assert out.shape == (B, T, CONCAT_DIM), out.shape
    assert jnp.allclose(out, ref, atol=1e-5, rtol=1e-5), "mismatch vs reference"

    print("KERNEL_OK")
</pallas_src>

<mosaic_0001>
module attributes {stable_mosaic.version = 11 : i64} {
  func.func @embedding_kernel(%arg0: i32, %arg1: memref<16x128xf32, #tpu.memory_space<vmem>>, %arg2: memref<128x128xf32, #tpu.memory_space<vmem>>, %arg3: memref<16x128xf32, #tpu.memory_space<vmem>>) attributes {dimension_semantics = [#tpu.dimension_semantics<parallel>], iteration_bounds = array<i64: 1>, scalar_prefetch = 0 : i64, scratch_operands = 0 : i64, tpu.core_type = #tpu.core_type<tc>, window_params = [{transform_indices = @transform_0, window_bounds = array<i64: 16, 128>}, {pipeline_mode = #tpu.pipeline_mode<synchronous>, transform_indices = @transform_1, window_bounds = array<i64: 128, 128>}, {transform_indices = @transform_2, window_bounds = array<i64: 16, 128>}]} {
    %c0 = arith.constant 0 : index
    %c0_0 = arith.constant 0 : index
    %0 = vector.load %arg1[%c0, %c0_0] : memref<16x128xf32, #tpu.memory_space<vmem>>, vector<16x128xf32>
    %c0_1 = arith.constant 0 : index
    %c0_2 = arith.constant 0 : index
    %1 = vector.load %arg2[%c0_1, %c0_2] : memref<128x128xf32, #tpu.memory_space<vmem>>, vector<128x128xf32>
    %cst = arith.constant dense<0.000000e+00> : vector<16x128xf32>
    %2 = tpu.matmul %0, %1, %cst {dimension_numbers = #tpu.dot_dimension_numbers<[1], [0], [0], [1], [0, 0, 1, 1], [], []>} : vector<16x128xf32>, vector<128x128xf32>, vector<16x128xf32> -> vector<16x128xf32>
    %c0_3 = arith.constant 0 : index
    %c0_4 = arith.constant 0 : index
    %3 = vector.load %arg3[%c0_3, %c0_4] : memref<16x128xf32, #tpu.memory_space<vmem>>, vector<16x128xf32>
    tpu.vector_store %arg3[%c0_3, %c0_4], %2 {strides = array<i32>} : memref<16x128xf32, #tpu.memory_space<vmem>>, vector<16x128xf32>,
    return
  }
  func.func @transform_0(%arg0: i32) -> (i32, i32) {
    %c0_i32 = arith.constant 0 : i32
    %c0_i32_0 = arith.constant 0 : i32
    return %arg0, %c0_i32 : i32, i32
  }
  func.func @transform_1(%arg0: i32) -> (i32, i32) {
    %c0_i32 = arith.constant 0 : i32
    %c0_i32_0 = arith.constant 0 : i32
    %c0_i32_1 = arith.constant 0 : i32
    return %c0_i32, %c0_i32_0 : i32, i32
  }
  func.func @transform_2(%arg0: i32) -> (i32, i32) {
    %c0_i32 = arith.constant 0 : i32
    %c0_i32_0 = arith.constant 0 : i32
    return %arg0, %c0_i32 : i32, i32
  }
}

</mosaic_0001>

<llo_original>
// kernel: tpu_custom_call.1
$region0: #{tpu_custom_call.1}
  #allocation0 [shape = 'u32[]', space=smem, size = 0x4, offset = 0x4, fixed_abs, tag = 'smem constant byte address 0x4 - core index']
  #allocation1 [shape = 'u32[144,128]{1,0:T(1,128)}', space=vmem, size = 0x12000, scoped, tag = 'internal scratch']
  %s0 = inlined_call_operand.hbm [shape: f32[16,128], index: 0, kind: input, shape index: {}]
  %s1 = inlined_call_operand.hbm [shape: f32[128,128], index: 1, kind: input, shape index: {}]
  %s2 = inlined_call_operand.hbm [shape: f32[16,128], index: 2, kind: output, shape index: {}]
  %s3 = sld [smem:[#allocation0]]
  $region26: #{tpu_custom_call.1} parent=0
    _
  %s5 = ssub.s32 1, %s3
  %s6 = scalar_select 0, %s5, %s3
  $region1: #{tpu_custom_call.1} parent=0
    #allocation2 [shape = 'u8[8192]{0}', space=vmem, size = 0x2000, scoped, tag = 'input window, operand 0, single buffered']
    #allocation3 [shape = 's32[1]{0}', space=sflag, size = 0x4, scoped, tag = 'scoped memory for tpu_custom_call.1']
    #allocation4 [shape = 's32[1]{0}', space=sflag, size = 0x4, scoped, tag = 'scoped memory for tpu_custom_call.1']
    #allocation5 [shape = 'u8[65536]{0}', space=vmem, size = 0x10000, scoped, tag = 'input window, operand 1, single buffered']
    #allocation6 [shape = 's32[1]{0}', space=sflag, size = 0x4, scoped, tag = 'scoped memory for tpu_custom_call.1']
    #allocation7 [shape = 'u8[8192]{0}', space=vmem, size = 0x2000, scoped, tag = 'output window, operand 0, single buffered']
    %7 = vsyncpa [#allocation3], 0
    %8 = vsyncpa [#allocation6], 0
    %9 = vsyncpa [#allocation4], 0
    // Predicated region
    $region2: #{tpu_custom_call.1} parent=1 // pred_check
      _
    $region3: #{tpu_custom_call.1} parent=1 // pred_check_branch
      %11 = sbr.rel (0) target = $region5
    $region4: #{tpu_custom_call.1} parent=1 // pred_region
      %s13 = ssub.s32 256, 256
      %14 = vsyncadd [#allocation3], %s13
      %s15 = sshll.u32 [#allocation2], 4
      %s16 = int_to_ptr.vmem [resolvable:$true] %s15
      %21 = dma.hbm_to_vmem [thread:$0]  %s0, 256, %s16, [#allocation3], 128, 128, 8
    $region5: #{tpu_custom_call.1} parent=1 // pred_fallthru
      _
    // Predicated region
    $region6: #{tpu_custom_call.1} parent=1 // pred_check
      _
    $region7: #{tpu_custom_call.1} parent=1 // pred_check_branch
      %23 = sbr.rel (0) target = $region9
    $region8: #{tpu_custom_call.1} parent=1 // pred_region
      %s25 = ssub.s32 2048, 2048
      %26 = vsyncadd [#allocation6], %s25
      %s27 = sshll.u32 [#allocation5], 4
      %s28 = int_to_ptr.vmem [resolvable:$true] %s27
      %33 = dma.hbm_to_vmem [thread:$0]  %s1, 2048, %s28, [#allocation6], 128, 128, 8
    $region9: #{tpu_custom_call.1} parent=1 // pred_fallthru
      _
    // Predicated region
    $region10: #{tpu_custom_call.1} parent=1 // pred_check
      _
    $region11: #{tpu_custom_call.1} parent=1 // pred_check_branch
      %35 = sbr.rel (0) target = $region13
    $region12: #{tpu_custom_call.1} parent=1 // pred_region
      %36 = dma.done [#allocation3], 256
    $region13: #{tpu_custom_call.1} parent=1 // pred_fallthru
      _
    // Predicated region
    $region14: #{tpu_custom_call.1} parent=1 // pred_check
      _
    $region15: #{tpu_custom_call.1} parent=1 // pred_check_branch
      %38 = sbr.rel (0) target = $region17
    $region16: #{tpu_custom_call.1} parent=1 // pred_region
      %39 = dma.done [#allocation6], 2048
    $region17: #{tpu_custom_call.1} parent=1 // pred_fallthru
      _
    %v40 = vld [vmem:[#allocation2] sm:$0xff]
    %v41 = vld [vmem:[#allocation2 + $0x8] sm:$0xff]
    %v42 = vld [vmem:[#allocation5] sm:$0xff]
    %v43 = vld [vmem:[#allocation5 + $0x8] sm:$0xff]
    %v44 = vld [vmem:[#allocation5 + $0x10] sm:$0xff]
    %v45 = vld [vmem:[#allocation5 + $0x18] sm:$0xff]
    %v46 = vld [vmem:[#allocation5 + $0x20] sm:$0xff]
    %v47 = vld [vmem:[#allocation5 + $0x28] sm:$0xff]
    %v48 = vld [vmem:[#allocation5 + $0x30] sm:$0xff]
    %v49 = vld [vmem:[#allocation5 + $0x38] sm:$0xff]
    %v50 = vld [vmem:[#allocation5 + $0x40] sm:$0xff]
    %v51 = vld [vmem:[#allocation5 + $0x48] sm:$0xff]
    %v52 = vld [vmem:[#allocation5 + $0x50] sm:$0xff]
    %v53 = vld [vmem:[#allocation5 + $0x58] sm:$0xff]
    %v54 = vld [vmem:[#allocation5 + $0x60] sm:$0xff]
    %v55 = vld [vmem:[#allocation5 + $0x68] sm:$0xff]
    %v56 = vld [vmem:[#allocation5 + $0x70] sm:$0xff]
    %v57 = vld [vmem:[#allocation5 + $0x78] sm:$0xff]
    %58 = vmatprep.subr.mxu0 0.0
    %59 = vmatpush1.msra.mxu0 %v42
    %60 = vmatprep.subr.mxu0 0.0
    %61 = vmatpush1.msra.mxu0 %v43
    %62 = vmatprep.subr.mxu0 0.0
    %63 = vmatpush1.msra.mxu0 %v44
    %64 = vmatprep.subr.mxu0 0.0
    %65 = vmatpush1.msra.mxu0 %v45
    %66 = vmatprep.subr.mxu0 0.0
    %67 = vmatpush1.msra.mxu0 %v46
    %68 = vmatprep.subr.mxu0 0.0
    %69 = vmatpush1.msra.mxu0 %v47
    %70 = vmatprep.subr.mxu0 0.0
    %71 = vmatpush1.msra.mxu0 %v48
    %72 = vmatprep.subr.mxu0 0.0
    %73 = vmatpush1.msra.mxu0 %v49
    %74 = vmatprep.subr.mxu0 0.0
    %75 = vmatpush1.msra.mxu0 %v50
    %76 = vmatprep.subr.mxu0 0.0
    %77 = vmatpush1.msra.mxu0 %v51
    %78 = vmatprep.subr.mxu0 0.0
    %79 = vmatpush1.msra.mxu0 %v52
    %80 = vmatprep.subr.mxu0 0.0
    %81 = vmatpush1.msra.mxu0 %v53
    %82 = vmatprep.subr.mxu0 0.0
    %83 = vmatpush1.msra.mxu0 %v54
    %84 = vmatprep.subr.mxu0 0.0
    %85 = vmatpush1.msra.mxu0 %v55
    %86 = vmatprep.subr.mxu0 0.0
    %87 = vmatpush1.msra.mxu0 %v56
    %88 = vmatprep.subr.mxu0 0.0
    %89 = vmatpush1.msra.mxu0 %v57
    %90 = vmatprep.subr.mxu0 0.0
    %91 = vmatpush1.msra.mxu0 0.0
    %92 = vmatprep.subr.mxu0 0.0
    %93 = vmatpush1.msra.mxu0 0.0
    %94 = vmatprep.subr.mxu0 0.0
    %95 = vmatpush1.msra.mxu0 0.0
    %96 = vmatprep.subr.mxu0 0.0
    %97 = vmatpush1.msra.mxu0 0.0
    %98 = vmatprep.subr.mxu0 0.0
    %99 = vmatpush1.msra.mxu0 0.0
    %100 = vmatprep.subr.mxu0 0.0
    %101 = vmatpush1.msra.mxu0 0.0
    %102 = vmatprep.subr.mxu0 0.0
    %103 = vmatpush1.msra.mxu0 0.0
    %104 = vmatprep.subr.mxu0 0.0
    %105 = vmatpush1.msra.mxu0 0.0
    %106 = vmatprep.subr.mxu0 0.0
    %107 = vmatpush1.msra.mxu0 0.0
    %108 = vmatprep.subr.mxu0 0.0
    %109 = vmatpush1.msra.mxu0 0.0
    %110 = vmatprep.subr.mxu0 0.0
    %111 = vmatpush1.msra.mxu0 0.0
    %112 = vmatprep.subr.mxu0 0.0
    %113 = vmatpush1.msra.mxu0 0.0
    %114 = vmatprep.subr.mxu0 0.0
    %115 = vmatpush1.msra.mxu0 0.0
    %116 = vmatprep.subr.mxu0 0.0
    %117 = vmatpush1.msra.mxu0 0.0
    %118 = vmatprep.subr.mxu0 0.0
    %119 = vmatpush1.msra.mxu0 0.0
    %120 = vmatprep.subr.mxu0 0.0
    %121 = vmatpush1.msra.mxu0 0.0
    %122 = vmatprep.mubr.f32.mxu0 0.0
    %123 = vmatmul.mubr.f32.gmra.mrb[0].mxu0 %v40
    %v124 = vpop.f32.mrb[0].mxu0
    %v125 = vadd.f32 0.0, %v124
    %v126 = vpop.f32.mrb[0].mxu0
    %127 = vmatprep.mubr.f32.mxu0 0.0
    %128 = vmatmul.mubr.f32.gmra.mrb[0].mxu0 %v41
    %v129 = vpop.f32.mrb[0].mxu0
    %v130 = vadd.f32 0.0, %v129
    %v131 = vpop.f32.mrb[0].mxu0
    %132 = vdwg.mxu0
    %133 = vst [vmem:[#allocation7] sm:$0xff] %v125
    %134 = vst [vmem:[#allocation7 + $0x8] sm:$0xff] %v130
    // Predicated region
    $region18: #{tpu_custom_call.1} parent=1 // pred_check
      _
    $region19: #{tpu_custom_call.1} parent=1 // pred_check_branch
      %136 = sbr.rel (0) target = $region21
    $region20: #{tpu_custom_call.1} parent=1 // pred_region
      %s138 = ssub.s32 256, 256
      %139 = vsyncadd [#allocation4], %s138
      %s140 = sshll.u32 [#allocation7], 4
      %s141 = int_to_ptr.vmem [resolvable:$true] %s140
      %146 = dma.vmem_to_hbm [thread:$0]  %s141, 256, %s2, [#allocation4], 128, 128, 8
    $region21: #{tpu_custom_call.1} parent=1 // pred_fallthru
      _
    // Predicated region
    $region22: #{tpu_custom_call.1} parent=1 // pred_check
      _
    $region23: #{tpu_custom_call.1} parent=1 // pred_check_branch
      %148 = sbr.rel (0) target = $region25
    $region24: #{tpu_custom_call.1} parent=1 // pred_region
      %149 = dma.done [#allocation4], 256
    $region25: #{tpu_custom_call.1} parent=1 // pred_fallthru
      _
    %150 = vsyncpa [#allocation3], 1
    %151 = vsyncpa [#allocation6], 1
    %152 = vsyncpa [#allocation4], 1

</llo_original>
